<compile_context>
chip_gen: v5e
topology: v5e:2x2
jax: 0.10.0
libtpu: 0.0.40
codegen_flags: <defaults>
</compile_context>

<pallas_src>
import math
import functools

import jax
import jax.numpy as jnp
from jax.experimental import pallas as pl
from jax.experimental.pallas import tpu as pltpu


# ----------------------------------------------------------------------------
# Parameter ("buffer") construction — deterministic, mirrors the torch __init__
# ----------------------------------------------------------------------------
def make_pe(d_model: int, max_len: int = 500) -> jnp.ndarray:
    """Returns the positional-encoding buffer with shape (max_len, 1, d_model)."""
    position = jnp.arange(0, max_len, dtype=jnp.float32)[:, None]            # (L, 1)
    div_term = jnp.exp(
        jnp.arange(0, d_model, 2, dtype=jnp.float32) * (-math.log(10000.0) / d_model)
    )                                                                         # (D/2,)
    pe = jnp.zeros((max_len, d_model), dtype=jnp.float32)
    pe = pe.at[:, 0::2].set(jnp.sin(position * div_term))
    pe = pe.at[:, 1::2].set(jnp.cos(position * div_term))
    # torch: pe.unsqueeze(0).transpose(0, 1) -> (max_len, 1, d_model)
    return pe[:, None, :]


# ----------------------------------------------------------------------------
# Pallas kernels (pure jnp elementwise — lowers on TPU and in interpret mode)
# ----------------------------------------------------------------------------
def _pe_add_kernel(x_ref, pe_ref, o_ref):
    # x_ref: (ts, B, D); pe_ref: (ts, 1, D) -> broadcast add over batch
    o_ref[...] = x_ref[...] + pe_ref[...]


def _pe_add_dropout_kernel(x_ref, pe_ref, mask_ref, o_ref):
    # mask_ref holds the pre-scaled keep mask: values in {0, 1/(1-p)}
    o_ref[...] = (x_ref[...] + pe_ref[...]) * mask_ref[...]


# ----------------------------------------------------------------------------
# Tile sizing: biggest seq block whose double-buffered footprint stays well
# under every generation's default scoped VMEM (v5e 16 MiB, v6e 32, v7x 32).
# ----------------------------------------------------------------------------
def _choose_block_seq(S: int, B: int, D: int, itemsize: int, n_bd_streams: int) -> int:
    total_budget = 8 * 1024 * 1024            # total VMEM budget (headroom on v5e/v7x)
    per_stage = total_budget // 2             # BlockSpec double-buffers each array
    row_bytes = (n_bd_streams * B * D + D) * itemsize   # x/out(/mask) rows + pe row
    return int(max(1, min(S, per_stage // max(1, row_bytes))))


# ----------------------------------------------------------------------------
# Wrapper
# ----------------------------------------------------------------------------
def positional_encoding(x, pe, *, dropout_p: float = 0.1,
                        training: bool = False, rng_key=None, block_seq=None):
    """x: (S, B, D); pe: (max_len, 1, D) with max_len >= S.  Returns (S, B, D)."""
    S, B, D = x.shape
    apply_dropout = bool(training) and float(dropout_p) > 0.0
    n_streams = 3 if apply_dropout else 2     # x + out (+ mask) streamed per block

    if block_seq is None:
        block_seq = _choose_block_seq(S, B, D, x.dtype.itemsize, n_streams)
    grid = (pl.cdiv(S, block_seq),)

    # Block last-two dims equal the full (B, D) dims, so the (8,128) rule is
    # satisfied; for realistic d_model (multiple of 128) the last dim is
    # lane-dense.  pe block is indexed out of the FULL buffer (no pre-slice)
    # and broadcast over batch inside the kernel (no B× pe HBM traffic).
    x_spec    = pl.BlockSpec((block_seq, B, D), lambda i: (i, 0, 0))
    pe_spec   = pl.BlockSpec((block_seq, 1, D), lambda i: (i, 0, 0))
    mask_spec = pl.BlockSpec((block_seq, B, D), lambda i: (i, 0, 0))
    out_spec  = pl.BlockSpec((block_seq, B, D), lambda i: (i, 0, 0))
    out_shape = jax.ShapeDtypeStruct((S, B, D), x.dtype)

    itemsize = x.dtype.itemsize
    bytes_accessed = n_streams * S * B * D * itemsize + S * D * itemsize
    flops = S * B * D * (2 if apply_dropout else 1)
    cost = pl.CostEstimate(flops=flops, transcendentals=0,
                           bytes_accessed=bytes_accessed)
    cparams = pltpu.CompilerParams(dimension_semantics=("parallel",))

    if not apply_dropout:
        return pl.pallas_call(
            _pe_add_kernel,
            out_shape=out_shape,
            grid_spec=pltpu.PrefetchScalarGridSpec(
                num_scalar_prefetch=0, grid=grid,
                in_specs=[x_spec, pe_spec], out_specs=out_spec),
            compiler_params=cparams,
            cost_estimate=cost,
        )(x, pe)

    if rng_key is None:
        raise ValueError("rng_key is required when training=True and dropout_p > 0")
    # Inverted dropout: pre-scaled keep mask, values in {0, 1/(1-p)}.
    keep = jax.random.bernoulli(rng_key, 1.0 - float(dropout_p), x.shape)
    mask = keep.astype(x.dtype) * jnp.asarray(1.0 / (1.0 - float(dropout_p)), x.dtype)

    return pl.pallas_call(
        _pe_add_dropout_kernel,
        out_shape=out_shape,
        grid_spec=pltpu.PrefetchScalarGridSpec(
            num_scalar_prefetch=0, grid=grid,
            in_specs=[x_spec, pe_spec, mask_spec], out_specs=out_spec),
        compiler_params=cparams,
        cost_estimate=cost,
    )(x, pe, mask)


# ----------------------------------------------------------------------------
# Main
# ----------------------------------------------------------------------------
if __name__ == "__main__":
    d_model = 32
    seq_len = 8
    batch = 2
    max_len = 500
    p = 0.1

    key = jax.random.PRNGKey(0)
    kx, kd = jax.random.split(key)
    x = jax.random.normal(kx, (seq_len, batch, d_model), dtype=jnp.float32)
    pe = make_pe(d_model, max_len)

    # Eval-mode forward (dropout is identity) — deterministic check vs pure JAX.
    out = positional_encoding(x, pe, dropout_p=p, training=False)
    out = jax.block_until_ready(out)
    ref = x + pe[:seq_len]
    assert out.shape == (seq_len, batch, d_model)
    assert jnp.allclose(out, ref, atol=1e-6), "eval-mode mismatch vs reference"

    # Training-mode forward — reproduce the same keep mask outside and compare.
    out_tr = positional_encoding(x, pe, dropout_p=p, training=True, rng_key=kd)
    out_tr = jax.block_until_ready(out_tr)
    keep = jax.random.bernoulli(kd, 1.0 - p, x.shape)
    ref_tr = ref * keep.astype(x.dtype) * (1.0 / (1.0 - p))
    assert jnp.allclose(out_tr, ref_tr, atol=1e-5), "train-mode mismatch vs reference"

    print("KERNEL_OK")
</pallas_src>

<mosaic_0001>
module attributes {stable_mosaic.version = 11 : i64} {
  func.func @_pe_add_kernel(%arg0: i32, %arg1: memref<8x2x32xf32, #tpu.memory_space<vmem>>, %arg2: memref<8x1x32xf32, #tpu.memory_space<vmem>>, %arg3: memref<8x2x32xf32, #tpu.memory_space<vmem>>) attributes {dimension_semantics = [#tpu.dimension_semantics<parallel>], iteration_bounds = array<i64: 1>, scalar_prefetch = 0 : i64, scratch_operands = 0 : i64, tpu.core_type = #tpu.core_type<tc>, window_params = [{transform_indices = @transform_0, window_bounds = array<i64: 8, 2, 32>}, {transform_indices = @transform_1, window_bounds = array<i64: 8, 1, 32>}, {transform_indices = @transform_2, window_bounds = array<i64: 8, 2, 32>}]} {
    %c0 = arith.constant 0 : index
    %c0_0 = arith.constant 0 : index
    %c0_1 = arith.constant 0 : index
    %0 = vector.load %arg1[%c0, %c0_0, %c0_1] : memref<8x2x32xf32, #tpu.memory_space<vmem>>, vector<8x2x32xf32>
    %c0_2 = arith.constant 0 : index
    %c0_3 = arith.constant 0 : index
    %c0_4 = arith.constant 0 : index
    %1 = vector.load %arg2[%c0_2, %c0_3, %c0_4] : memref<8x1x32xf32, #tpu.memory_space<vmem>>, vector<8x1x32xf32>
    %2 = vector.broadcast %1 : vector<8x1x32xf32> to vector<8x2x32xf32>
    %3 = arith.addf %0, %2 : vector<8x2x32xf32>
    %c0_5 = arith.constant 0 : index
    %c0_6 = arith.constant 0 : index
    %c0_7 = arith.constant 0 : index
    %4 = vector.load %arg3[%c0_5, %c0_6, %c0_7] : memref<8x2x32xf32, #tpu.memory_space<vmem>>, vector<8x2x32xf32>
    tpu.vector_store %arg3[%c0_5, %c0_6, %c0_7], %3 {strides = array<i32>} : memref<8x2x32xf32, #tpu.memory_space<vmem>>, vector<8x2x32xf32>,
    return
  }
  func.func @transform_0(%arg0: i32) -> (i32, i32, i32) {
    %c0_i32 = arith.constant 0 : i32
    %c0_i32_0 = arith.constant 0 : i32
    %c0_i32_1 = arith.constant 0 : i32
    return %arg0, %c0_i32, %c0_i32_0 : i32, i32, i32
  }
  func.func @transform_1(%arg0: i32) -> (i32, i32, i32) {
    %c0_i32 = arith.constant 0 : i32
    %c0_i32_0 = arith.constant 0 : i32
    %c0_i32_1 = arith.constant 0 : i32
    return %arg0, %c0_i32, %c0_i32_0 : i32, i32, i32
  }
  func.func @transform_2(%arg0: i32) -> (i32, i32, i32) {
    %c0_i32 = arith.constant 0 : i32
    %c0_i32_0 = arith.constant 0 : i32
    %c0_i32_1 = arith.constant 0 : i32
    return %arg0, %c0_i32, %c0_i32_0 : i32, i32, i32
  }
}

</mosaic_0001>

<llo_original>
// kernel: tpu_custom_call.1
$region0: #{tpu_custom_call.1}
  #allocation0 [shape = 'u32[]', space=smem, size = 0x4, offset = 0x4, fixed_abs, tag = 'smem constant byte address 0x4 - core index']
  #allocation1 [shape = 'u32[72,128]{1,0:T(1,128)}', space=vmem, size = 0x9000, scoped, tag = 'internal scratch']
  %s0 = inlined_call_operand.vmem [shape: f32[8,2,32], index: 0, kind: input, shape index: {}]
  %s1 = inlined_call_operand.vmem [shape: f32[500,1,32], index: 1, kind: input, shape index: {}]
  %s2 = inlined_call_operand.hbm [shape: f32[8,2,32], index: 2, kind: output, shape index: {}]
  %s3 = sld [smem:[#allocation0]]
  $region18: #{tpu_custom_call.1} parent=0
    _
  %s5 = ssub.s32 1, %s3
  %s6 = scalar_select 0, %s5, %s3
  $region1: #{tpu_custom_call.1} parent=0
    #allocation2 [shape = 'u8[8192]{0}', space=vmem, size = 0x2000, scoped, tag = 'output window, operand 0, single buffered']
    #allocation3 [shape = 's32[1]{0}', space=sflag, size = 0x4, scoped, tag = 'scoped memory for tpu_custom_call.1']
    %7 = vsyncpa [#allocation3], 0
    // Predicated region
    $region2: #{tpu_custom_call.1} parent=1 // pred_check
      _
    $region3: #{tpu_custom_call.1} parent=1 // pred_check_branch
      %9 = sbr.rel (0) target = $region5
    $region4: #{tpu_custom_call.1} parent=1 // pred_region
      _
    $region5: #{tpu_custom_call.1} parent=1 // pred_fallthru
      _
    // Predicated region
    $region6: #{tpu_custom_call.1} parent=1 // pred_check
      _
    $region7: #{tpu_custom_call.1} parent=1 // pred_check_branch
      %11 = sbr.rel (0) target = $region9
    $region8: #{tpu_custom_call.1} parent=1 // pred_region
      _
    $region9: #{tpu_custom_call.1} parent=1 // pred_fallthru
      _
    %v12 = vld [vmem:[%s0] sm:$0x3]
    %v13 = vld [vmem:[%s0 + $0x2] sm:$0x3]
    %v14 = vld [vmem:[%s0 + $0x4] sm:$0x3]
    %v15 = vld [vmem:[%s0 + $0x6] sm:$0x3]
    %v16 = vld [vmem:[%s0 + $0x8] sm:$0x3]
    %v17 = vld [vmem:[%s0 + $0xa] sm:$0x3]
    %v18 = vld [vmem:[%s0 + $0xc] sm:$0x3]
    %v19 = vld [vmem:[%s0 + $0xe] sm:$0x3]
    %v20 = vld [vmem:[%s1] sm:$0x1]
    %v21 = vld [vmem:[%s1 + $0x1] sm:$0x1]
    %v22 = vld [vmem:[%s1 + $0x2] sm:$0x1]
    %v23 = vld [vmem:[%s1 + $0x3] sm:$0x1]
    %v24 = vld [vmem:[%s1 + $0x4] sm:$0x1]
    %v25 = vld [vmem:[%s1 + $0x5] sm:$0x1]
    %v26 = vld [vmem:[%s1 + $0x6] sm:$0x1]
    %v27 = vld [vmem:[%s1 + $0x7] sm:$0x1]
    %v36 = vperm.slane %v20, 0
    %v37 = vperm.slane %v21, 0
    %v38 = vperm.slane %v22, 0
    %v39 = vperm.slane %v23, 0
    %v40 = vperm.slane %v24, 0
    %v41 = vperm.slane %v25, 0
    %v42 = vperm.slane %v26, 0
    %v43 = vperm.slane %v27, 0
    %v52 = vadd.f32 %v12, %v36
    %v53 = vadd.f32 %v13, %v37
    %v54 = vadd.f32 %v14, %v38
    %v55 = vadd.f32 %v15, %v39
    %v56 = vadd.f32 %v16, %v40
    %v57 = vadd.f32 %v17, %v41
    %v58 = vadd.f32 %v18, %v42
    %v59 = vadd.f32 %v19, %v43
    %vm60 = vcmask 254976
    %61 = vst.msk [vmem:[#allocation2] sm:$0x3] %vm60, %v52
    %62 = vst.msk [vmem:[#allocation2 + $0x2] sm:$0x3] %vm60, %v53
    %63 = vst.msk [vmem:[#allocation2 + $0x4] sm:$0x3] %vm60, %v54
    %64 = vst.msk [vmem:[#allocation2 + $0x6] sm:$0x3] %vm60, %v55
    %65 = vst.msk [vmem:[#allocation2 + $0x8] sm:$0x3] %vm60, %v56
    %66 = vst.msk [vmem:[#allocation2 + $0xa] sm:$0x3] %vm60, %v57
    %67 = vst.msk [vmem:[#allocation2 + $0xc] sm:$0x3] %vm60, %v58
    %68 = vst.msk [vmem:[#allocation2 + $0xe] sm:$0x3] %vm60, %v59
    // Predicated region
    $region10: #{tpu_custom_call.1} parent=1 // pred_check
      _
    $region11: #{tpu_custom_call.1} parent=1 // pred_check_branch
      %70 = sbr.rel (0) target = $region13
    $region12: #{tpu_custom_call.1} parent=1 // pred_region
      %72 = vsyncadd [#allocation3], 0
      %s73 = sshll.u32 [#allocation2], 4
      %s74 = int_to_ptr.vmem [resolvable:$true] %s73
      %s75 = sshll.u32 %s2, 4
      %s76 = int_to_ptr.hbm [resolvable:$true] %s75
      %81 = dma.vmem_to_hbm [thread:$0]  %s74, 256, %s76, [#allocation3], 32, 32, 2
    $region13: #{tpu_custom_call.1} parent=1 // pred_fallthru
      _
    // Predicated region
    $region14: #{tpu_custom_call.1} parent=1 // pred_check
      _
    $region15: #{tpu_custom_call.1} parent=1 // pred_check_branch
      %83 = sbr.rel (0) target = $region17
    $region16: #{tpu_custom_call.1} parent=1 // pred_region
      %85 = dma.done [#allocation3], 256
    $region17: #{tpu_custom_call.1} parent=1 // pred_fallthru
      _
    %86 = vsyncpa [#allocation3], 1

</llo_original>
